<compile_context>
chip_gen: v7x
topology: tpu7x:2x2x1
jax: 0.10.0
libtpu: 0.0.40
codegen_flags: <defaults>
</compile_context>

<pallas_src>
import functools
import math

import jax
import jax.numpy as jnp
from jax.experimental import pallas as pl
from jax.experimental.pallas import tpu as pltpu


def _gating_forward_kernel(x_ref, r_ref,
                           w1_ref, b1_ref, w2_ref, b2_ref,
                           w3_ref, b3_ref, w4_ref, b4_ref,
                           o_ref, *, inv_temperature):
    # ---- MLP gating head: 3 hidden layers + output projection ------------
    # Weights arrive in bf16 (or whatever the caller prepped); activations
    # are cast to that dtype right before each dot so the MXU sees its
    # native operand type, and accumulation is always f32.
    cdt = w1_ref.dtype

    h = jnp.dot(x_ref[...].astype(cdt), w1_ref[...],
                preferred_element_type=jnp.float32)
    h = jnp.maximum(h + b1_ref[...].astype(jnp.float32), 0.0)
    # TODO(synk): training-mode dropout (p=0.2) is not implemented; eval forward only.

    h = jnp.dot(h.astype(w2_ref.dtype), w2_ref[...],
                preferred_element_type=jnp.float32)
    h = jnp.maximum(h + b2_ref[...].astype(jnp.float32), 0.0)

    h = jnp.dot(h.astype(w3_ref.dtype), w3_ref[...],
                preferred_element_type=jnp.float32)
    h = jnp.maximum(h + b3_ref[...].astype(jnp.float32), 0.0)

    logits = jnp.dot(h.astype(w4_ref.dtype), w4_ref[...],
                     preferred_element_type=jnp.float32)
    logits = (logits + b4_ref[...].astype(jnp.float32)) * inv_temperature

    # ---- temperature softmax fused with the reward mixing -----------------
    #   out = sum_n r_n * e_n / sum_n e_n     (rows of e are unnormalized)
    m = jnp.max(logits, axis=-1, keepdims=True)
    e = jnp.exp(logits - m)                                   # (TB, N)
    r = r_ref[...].astype(jnp.float32)
    num = jnp.sum(r * e, axis=-1, keepdims=True)              # (TB, 1)
    den = jnp.sum(e, axis=-1, keepdims=True)                  # (TB, 1)
    mixed = num * pl.reciprocal(den, approx=True)             # (TB, 1)

    # ---- lane-dense store: one (1, TB) output row per batch tile ----------
    tb = o_ref.shape[-1]
    o_ref[...] = mixed.reshape(1, tb).astype(o_ref.dtype)


def prepare_gating_params(params, compute_dtype=jnp.bfloat16):
    """One-time parameter prep: bf16 MXU weights, f32 biases (row vectors)."""
    return dict(
        w1=params["w1"].astype(compute_dtype), b1=params["b1"].reshape(1, -1).astype(jnp.float32),
        w2=params["w2"].astype(compute_dtype), b2=params["b2"].reshape(1, -1).astype(jnp.float32),
        w3=params["w3"].astype(compute_dtype), b3=params["b3"].reshape(1, -1).astype(jnp.float32),
        w4=params["w4"].astype(compute_dtype), b4=params["b4"].reshape(1, -1).astype(jnp.float32),
    )


def gating_network_forward(x, r, prepped, *, temperature=10.0, block_b=1024):
    """Pallas wrapper matching GatingNetwork.forward(x, r) in eval mode.

    x:       (batch, context_size)
    r:       (batch, n_objectives)
    prepped: output of prepare_gating_params (w_i in bf16, b_i f32 rows)
    returns: (batch,)
    """
    B, C = x.shape
    Br, N = r.shape
    assert Br == B, "x and r must share the batch dimension"

    w1, b1 = prepped["w1"], prepped["b1"]
    w2, b2 = prepped["w2"], prepped["b2"]
    w3, b3 = prepped["w3"], prepped["b3"]
    w4, b4 = prepped["w4"], prepped["b4"]
    H = w1.shape[1]

    # Batch tile: multiple of 128 (lane-dense output row), capped by block_b,
    # and chosen so the grid keeps >= 2 steps when the batch allows it
    # (both v7x TensorCores get work; harmless on 1-TC v5e/v6e).
    block_b = max(128, (int(block_b) // 128) * 128)
    tb = pl.cdiv(pl.cdiv(B, 2), 128) * 128      # ~half the batch, rounded up
    tb = max(128, min(tb, block_b))
    bp = pl.cdiv(B, tb) * tb
    if bp != B:
        # Padded rows are zeros -> finite logits, softmax well defined, r rows
        # are zero so the padded outputs are 0 and sliced off below.
        x = jnp.pad(x, ((0, bp - B), (0, 0)))
        r = jnp.pad(r, ((0, bp - B), (0, 0)))
    g = bp // tb

    kernel = functools.partial(_gating_forward_kernel,
                               inv_temperature=1.0 / float(temperature))

    out = pl.pallas_call(
        kernel,
        out_shape=jax.ShapeDtypeStruct((g, tb), jnp.float32),
        grid_spec=pltpu.PrefetchScalarGridSpec(
            num_scalar_prefetch=0,
            grid=(g,),
            in_specs=[
                pl.BlockSpec((tb, C), lambda i: (i, 0)),   # x batch tile
                pl.BlockSpec((tb, N), lambda i: (i, 0)),   # r batch tile
                pl.BlockSpec((C, H), lambda i: (0, 0)),    # W1 (grid-invariant)
                pl.BlockSpec((1, H), lambda i: (0, 0)),    # b1
                pl.BlockSpec((H, H), lambda i: (0, 0)),    # W2
                pl.BlockSpec((1, H), lambda i: (0, 0)),    # b2
                pl.BlockSpec((H, H), lambda i: (0, 0)),    # W3
                pl.BlockSpec((1, H), lambda i: (0, 0)),    # b3
                pl.BlockSpec((H, N), lambda i: (0, 0)),    # W4
                pl.BlockSpec((1, N), lambda i: (0, 0)),    # b4
            ],
            out_specs=pl.BlockSpec((1, tb), lambda i: (i, 0)),
        ),
        compiler_params=pltpu.CompilerParams(
            dimension_semantics=("parallel",),
        ),
    )(x, r, w1, b1, w2, b2, w3, b3, w4, b4)

    return out.reshape(bp)[:B]


def _gating_reference(x, r, params, temperature):
    h = jnp.maximum(x @ params["w1"] + params["b1"], 0.0)
    h = jnp.maximum(h @ params["w2"] + params["b2"], 0.0)
    h = jnp.maximum(h @ params["w3"] + params["b3"], 0.0)
    logits = (h @ params["w4"] + params["b4"]) / temperature
    gating = jax.nn.softmax(logits, axis=1)
    return jnp.sum(r * gating, axis=-1)


if __name__ == "__main__":
    key = jax.random.PRNGKey(0)
    kx, kr, k1, k2, k3, k4 = jax.random.split(key, 6)

    batch = 20            # not a multiple of the tile -> exercises padding path
    context_size = 32
    hidden_dim = 64
    n_objectives = 4
    temperature = 10.0

    x = jax.random.normal(kx, (batch, context_size), dtype=jnp.float32)
    r = jax.random.normal(kr, (batch, n_objectives), dtype=jnp.float32)

    def init_linear(k, fan_in, fan_out):
        scale = 1.0 / math.sqrt(fan_in)
        kw, kb = jax.random.split(k)
        w = jax.random.uniform(kw, (fan_in, fan_out), jnp.float32, -scale, scale)
        b = jax.random.uniform(kb, (fan_out,), jnp.float32, -scale, scale)
        return w, b

    w1, b1 = init_linear(k1, context_size, hidden_dim)
    w2, b2 = init_linear(k2, hidden_dim, hidden_dim)
    w3, b3 = init_linear(k3, hidden_dim, hidden_dim)
    w4, b4 = init_linear(k4, hidden_dim, n_objectives)
    params = dict(w1=w1, b1=b1, w2=w2, b2=b2, w3=w3, b3=b3, w4=w4, b4=b4)

    # One-time parameter prep (bf16 MXU weights, f32 biases).
    prepped = prepare_gating_params(params, compute_dtype=jnp.bfloat16)

    out = gating_network_forward(x, r, prepped, temperature=temperature)
    jax.block_until_ready(out)

    ref = _gating_reference(x, r, params, temperature)
    assert out.shape == (batch,)
    max_err = float(jnp.max(jnp.abs(out - ref)))
    assert jnp.allclose(out, ref, atol=5e-3, rtol=5e-3), f"max abs err {max_err}"

    print("KERNEL_OK")
</pallas_src>

<mosaic_0001>
module attributes {stable_mosaic.version = 11 : i64} {
  func.func @_gating_forward_kernel(%arg0: i32, %arg1: memref<128x32xf32, #tpu.memory_space<vmem>>, %arg2: memref<128x4xf32, #tpu.memory_space<vmem>>, %arg3: memref<32x64xbf16, #tpu.memory_space<vmem>>, %arg4: memref<1x64xf32, #tpu.memory_space<vmem>>, %arg5: memref<64x64xbf16, #tpu.memory_space<vmem>>, %arg6: memref<1x64xf32, #tpu.memory_space<vmem>>, %arg7: memref<64x64xbf16, #tpu.memory_space<vmem>>, %arg8: memref<1x64xf32, #tpu.memory_space<vmem>>, %arg9: memref<64x4xbf16, #tpu.memory_space<vmem>>, %arg10: memref<1x4xf32, #tpu.memory_space<vmem>>, %arg11: memref<1x128xf32, #tpu.memory_space<vmem>>) attributes {dimension_semantics = [#tpu.dimension_semantics<parallel>], iteration_bounds = array<i64: 1>, scalar_prefetch = 0 : i64, scratch_operands = 0 : i64, tpu.core_type = #tpu.core_type<tc>, window_params = [{transform_indices = @transform_0, window_bounds = array<i64: 128, 32>}, {transform_indices = @transform_1, window_bounds = array<i64: 128, 4>}, {pipeline_mode = #tpu.pipeline_mode<synchronous>, transform_indices = @transform_2, window_bounds = array<i64: 32, 64>}, {pipeline_mode = #tpu.pipeline_mode<synchronous>, transform_indices = @transform_3, window_bounds = array<i64: 1, 64>}, {pipeline_mode = #tpu.pipeline_mode<synchronous>, transform_indices = @transform_4, window_bounds = array<i64: 64, 64>}, {pipeline_mode = #tpu.pipeline_mode<synchronous>, transform_indices = @transform_5, window_bounds = array<i64: 1, 64>}, {pipeline_mode = #tpu.pipeline_mode<synchronous>, transform_indices = @transform_6, window_bounds = array<i64: 64, 64>}, {pipeline_mode = #tpu.pipeline_mode<synchronous>, transform_indices = @transform_7, window_bounds = array<i64: 1, 64>}, {pipeline_mode = #tpu.pipeline_mode<synchronous>, transform_indices = @transform_8, window_bounds = array<i64: 64, 4>}, {pipeline_mode = #tpu.pipeline_mode<synchronous>, transform_indices = @transform_9, window_bounds = array<i64: 1, 4>}, {transform_indices = @transform_10, window_bounds = array<i64: 1, 128>}]} {
    %c0 = arith.constant 0 : index
    %c0_0 = arith.constant 0 : index
    %0 = vector.load %arg1[%c0, %c0_0] : memref<128x32xf32, #tpu.memory_space<vmem>>, vector<128x32xf32>
    %1 = arith.truncf %0 : vector<128x32xf32> to vector<128x32xbf16>
    %c0_1 = arith.constant 0 : index
    %c0_2 = arith.constant 0 : index
    %2 = vector.load %arg3[%c0_1, %c0_2] : memref<32x64xbf16, #tpu.memory_space<vmem>>, vector<32x64xbf16>
    %cst = arith.constant dense<0.000000e+00> : vector<128x64xf32>
    %3 = tpu.matmul %1, %2, %cst {dimension_numbers = #tpu.dot_dimension_numbers<[1], [0], [0], [1], [0, 0, 1, 1], [], []>} : vector<128x32xbf16>, vector<32x64xbf16>, vector<128x64xf32> -> vector<128x64xf32>
    %c0_3 = arith.constant 0 : index
    %c0_4 = arith.constant 0 : index
    %4 = vector.load %arg4[%c0_3, %c0_4] : memref<1x64xf32, #tpu.memory_space<vmem>>, vector<1x64xf32>
    %5 = vector.broadcast %4 : vector<1x64xf32> to vector<128x64xf32>
    %6 = arith.addf %3, %5 : vector<128x64xf32>
    %cst_5 = arith.constant 0.000000e+00 : f32
    %7 = vector.broadcast %cst_5 : f32 to vector<128x64xf32>
    %8 = arith.maximumf %6, %7 : vector<128x64xf32>
    %9 = arith.truncf %8 : vector<128x64xf32> to vector<128x64xbf16>
    %c0_6 = arith.constant 0 : index
    %c0_7 = arith.constant 0 : index
    %10 = vector.load %arg5[%c0_6, %c0_7] : memref<64x64xbf16, #tpu.memory_space<vmem>>, vector<64x64xbf16>
    %cst_8 = arith.constant dense<0.000000e+00> : vector<128x64xf32>
    %11 = tpu.matmul %9, %10, %cst_8 {dimension_numbers = #tpu.dot_dimension_numbers<[1], [0], [0], [1], [0, 0, 1, 1], [], []>} : vector<128x64xbf16>, vector<64x64xbf16>, vector<128x64xf32> -> vector<128x64xf32>
    %c0_9 = arith.constant 0 : index
    %c0_10 = arith.constant 0 : index
    %12 = vector.load %arg6[%c0_9, %c0_10] : memref<1x64xf32, #tpu.memory_space<vmem>>, vector<1x64xf32>
    %13 = vector.broadcast %12 : vector<1x64xf32> to vector<128x64xf32>
    %14 = arith.addf %11, %13 : vector<128x64xf32>
    %cst_11 = arith.constant 0.000000e+00 : f32
    %15 = vector.broadcast %cst_11 : f32 to vector<128x64xf32>
    %16 = arith.maximumf %14, %15 : vector<128x64xf32>
    %17 = arith.truncf %16 : vector<128x64xf32> to vector<128x64xbf16>
    %c0_12 = arith.constant 0 : index
    %c0_13 = arith.constant 0 : index
    %18 = vector.load %arg7[%c0_12, %c0_13] : memref<64x64xbf16, #tpu.memory_space<vmem>>, vector<64x64xbf16>
    %cst_14 = arith.constant dense<0.000000e+00> : vector<128x64xf32>
    %19 = tpu.matmul %17, %18, %cst_14 {dimension_numbers = #tpu.dot_dimension_numbers<[1], [0], [0], [1], [0, 0, 1, 1], [], []>} : vector<128x64xbf16>, vector<64x64xbf16>, vector<128x64xf32> -> vector<128x64xf32>
    %c0_15 = arith.constant 0 : index
    %c0_16 = arith.constant 0 : index
    %20 = vector.load %arg8[%c0_15, %c0_16] : memref<1x64xf32, #tpu.memory_space<vmem>>, vector<1x64xf32>
    %21 = vector.broadcast %20 : vector<1x64xf32> to vector<128x64xf32>
    %22 = arith.addf %19, %21 : vector<128x64xf32>
    %cst_17 = arith.constant 0.000000e+00 : f32
    %23 = vector.broadcast %cst_17 : f32 to vector<128x64xf32>
    %24 = arith.maximumf %22, %23 : vector<128x64xf32>
    %25 = arith.truncf %24 : vector<128x64xf32> to vector<128x64xbf16>
    %c0_18 = arith.constant 0 : index
    %c0_19 = arith.constant 0 : index
    %26 = vector.load %arg9[%c0_18, %c0_19] : memref<64x4xbf16, #tpu.memory_space<vmem>>, vector<64x4xbf16>
    %cst_20 = arith.constant dense<0.000000e+00> : vector<128x4xf32>
    %27 = tpu.matmul %25, %26, %cst_20 {dimension_numbers = #tpu.dot_dimension_numbers<[1], [0], [0], [1], [0, 0, 1, 1], [], []>} : vector<128x64xbf16>, vector<64x4xbf16>, vector<128x4xf32> -> vector<128x4xf32>
    %c0_21 = arith.constant 0 : index
    %c0_22 = arith.constant 0 : index
    %28 = vector.load %arg10[%c0_21, %c0_22] : memref<1x4xf32, #tpu.memory_space<vmem>>, vector<1x4xf32>
    %29 = vector.broadcast %28 : vector<1x4xf32> to vector<128x4xf32>
    %30 = arith.addf %27, %29 : vector<128x4xf32>
    %cst_23 = arith.constant 1.000000e-01 : f32
    %31 = vector.broadcast %cst_23 : f32 to vector<128x4xf32>
    %32 = arith.mulf %30, %31 : vector<128x4xf32>
    %cst_24 = arith.constant dense<0xFF800000> : vector<128xf32>
    %33 = vector.multi_reduction <maximumf>, %32, %cst_24 [1] : vector<128x4xf32> to vector<128xf32>
    %34 = vector.shape_cast %33 : vector<128xf32> to vector<128x1xf32>
    %35 = vector.broadcast %34 : vector<128x1xf32> to vector<128x4xf32>
    %36 = arith.subf %32, %35 : vector<128x4xf32>
    %37 = math.exp %36 : vector<128x4xf32>
    %c0_25 = arith.constant 0 : index
    %c0_26 = arith.constant 0 : index
    %38 = vector.load %arg2[%c0_25, %c0_26] : memref<128x4xf32, #tpu.memory_space<vmem>>, vector<128x4xf32>
    %39 = arith.mulf %38, %37 : vector<128x4xf32>
    %cst_27 = arith.constant dense<0.000000e+00> : vector<128xf32>
    %40 = vector.multi_reduction <add>, %39, %cst_27 [1] : vector<128x4xf32> to vector<128xf32>
    %41 = vector.shape_cast %40 : vector<128xf32> to vector<128x1xf32>
    %cst_28 = arith.constant dense<0.000000e+00> : vector<128xf32>
    %42 = vector.multi_reduction <add>, %37, %cst_28 [1] : vector<128x4xf32> to vector<128xf32>
    %43 = vector.shape_cast %42 : vector<128xf32> to vector<128x1xf32>
    %44 = tpu.reciprocal %43 {approx = true} : vector<128x1xf32> -> vector<128x1xf32>
    %45 = arith.mulf %41, %44 : vector<128x1xf32>
    %46 = vector.shape_cast %45 : vector<128x1xf32> to vector<1x128xf32>
    %c0_29 = arith.constant 0 : index
    %c0_30 = arith.constant 0 : index
    %47 = vector.load %arg11[%c0_29, %c0_30] : memref<1x128xf32, #tpu.memory_space<vmem>>, vector<1x128xf32>
    tpu.vector_store %arg11[%c0_29, %c0_30], %46 {strides = array<i32>} : memref<1x128xf32, #tpu.memory_space<vmem>>, vector<1x128xf32>,
    return
  }
  func.func @transform_0(%arg0: i32) -> (i32, i32) {
    %c0_i32 = arith.constant 0 : i32
    %c0_i32_0 = arith.constant 0 : i32
    return %arg0, %c0_i32 : i32, i32
  }
  func.func @transform_1(%arg0: i32) -> (i32, i32) {
    %c0_i32 = arith.constant 0 : i32
    %c0_i32_0 = arith.constant 0 : i32
    return %arg0, %c0_i32 : i32, i32
  }
  func.func @transform_2(%arg0: i32) -> (i32, i32) {
    %c0_i32 = arith.constant 0 : i32
    %c0_i32_0 = arith.constant 0 : i32
    %c0_i32_1 = arith.constant 0 : i32
    return %c0_i32, %c0_i32_0 : i32, i32
  }
  func.func @transform_3(%arg0: i32) -> (i32, i32) {
    %c0_i32 = arith.constant 0 : i32
    %c0_i32_0 = arith.constant 0 : i32
    %c0_i32_1 = arith.constant 0 : i32
    return %c0_i32, %c0_i32_0 : i32, i32
  }
  func.func @transform_4(%arg0: i32) -> (i32, i32) {
    %c0_i32 = arith.constant 0 : i32
    %c0_i32_0 = arith.constant 0 : i32
    %c0_i32_1 = arith.constant 0 : i32
    return %c0_i32, %c0_i32_0 : i32, i32
  }
  func.func @transform_5(%arg0: i32) -> (i32, i32) {
    %c0_i32 = arith.constant 0 : i32
    %c0_i32_0 = arith.constant 0 : i32
    %c0_i32_1 = arith.constant 0 : i32
    return %c0_i32, %c0_i32_0 : i32, i32
  }
  func.func @transform_6(%arg0: i32) -> (i32, i32) {
    %c0_i32 = arith.constant 0 : i32
    %c0_i32_0 = arith.constant 0 : i32
    %c0_i32_1 = arith.constant 0 : i32
    return %c0_i32, %c0_i32_0 : i32, i32
  }
  func.func @transform_7(%arg0: i32) -> (i32, i32) {
    %c0_i32 = arith.constant 0 : i32
    %c0_i32_0 = arith.constant 0 : i32
    %c0_i32_1 = arith.constant 0 : i32
    return %c0_i32, %c0_i32_0 : i32, i32
  }
  func.func @transform_8(%arg0: i32) -> (i32, i32) {
    %c0_i32 = arith.constant 0 : i32
    %c0_i32_0 = arith.constant 0 : i32
    %c0_i32_1 = arith.constant 0 : i32
    return %c0_i32, %c0_i32_0 : i32, i32
  }
  func.func @transform_9(%arg0: i32) -> (i32, i32) {
    %c0_i32 = arith.constant 0 : i32
    %c0_i32_0 = arith.constant 0 : i32
    %c0_i32_1 = arith.constant 0 : i32
    return %c0_i32, %c0_i32_0 : i32, i32
  }
  func.func @transform_10(%arg0: i32) -> (i32, i32) {
    %c0_i32 = arith.constant 0 : i32
    %c0_i32_0 = arith.constant 0 : i32
    return %arg0, %c0_i32 : i32, i32
  }
}

</mosaic_0001>

<llo_original>
// kernel: tpu_custom_call.1
$region0: #{tpu_custom_call.1}
  #allocation0 [shape = 'u32[]', space=smem, size = 0x4, offset = 0x4, fixed_abs, tag = 'smem constant byte address 0x4 - core index']
  #allocation1 [shape = 'u32[144,128]{1,0:T(1,128)}', space=vmem, size = 0x12000, scoped, tag = 'internal scratch']
  %s0 = inlined_call_operand.vmem [shape: f32[128,32], index: 0, kind: input, shape index: {}]
  %s1 = inlined_call_operand.vmem [shape: f32[128,4], index: 1, kind: input, shape index: {}]
  %s2 = inlined_call_operand.vmem [shape: bf16[32,64], index: 2, kind: input, shape index: {}]
  %s3 = inlined_call_operand.vmem [shape: f32[1,64], index: 3, kind: input, shape index: {}]
  %s4 = inlined_call_operand.vmem [shape: bf16[64,64], index: 4, kind: input, shape index: {}]
  %s5 = inlined_call_operand.vmem [shape: f32[1,64], index: 5, kind: input, shape index: {}]
  %s6 = inlined_call_operand.vmem [shape: bf16[64,64], index: 6, kind: input, shape index: {}]
  %s7 = inlined_call_operand.vmem [shape: f32[1,64], index: 7, kind: input, shape index: {}]
  %s8 = inlined_call_operand.vmem [shape: bf16[64,4], index: 8, kind: input, shape index: {}]
  %s9 = inlined_call_operand.vmem [shape: f32[1,4], index: 9, kind: input, shape index: {}]
  %s10 = inlined_call_operand.hbm [shape: f32[1,128], index: 10, kind: output, shape index: {}]
  %s11 = sld [smem:[#allocation0]]
  $region50: #{tpu_custom_call.1} parent=0
    _
  %s13 = ssub.s32 1, %s11
  %s14 = scalar_select 0, %s13, %s11
  $region1: #{tpu_custom_call.1} parent=0
    #allocation2 [shape = 'u8[512]{0}', space=vmem, size = 0x400, scoped, tag = 'output window, operand 0, single buffered']
    #allocation3 [shape = 's32[1]{0}', space=sflag, size = 0x4, scoped, tag = 'scoped memory for tpu_custom_call.1']
    %15 = vsyncpa [#allocation3], 0
    // Predicated region
    $region2: #{tpu_custom_call.1} parent=1 // pred_check
      _
    $region3: #{tpu_custom_call.1} parent=1 // pred_check_branch
      %17 = sbr.rel (0) target = $region5
    $region4: #{tpu_custom_call.1} parent=1 // pred_region
      _
    $region5: #{tpu_custom_call.1} parent=1 // pred_fallthru
      _
    // Predicated region
    $region6: #{tpu_custom_call.1} parent=1 // pred_check
      _
    $region7: #{tpu_custom_call.1} parent=1 // pred_check_branch
      %19 = sbr.rel (0) target = $region9
    $region8: #{tpu_custom_call.1} parent=1 // pred_region
      _
    $region9: #{tpu_custom_call.1} parent=1 // pred_fallthru
      _
    // Predicated region
    $region10: #{tpu_custom_call.1} parent=1 // pred_check
      _
    $region11: #{tpu_custom_call.1} parent=1 // pred_check_branch
      %21 = sbr.rel (0) target = $region13
    $region12: #{tpu_custom_call.1} parent=1 // pred_region
      _
    $region13: #{tpu_custom_call.1} parent=1 // pred_fallthru
      _
    // Predicated region
    $region14: #{tpu_custom_call.1} parent=1 // pred_check
      _
    $region15: #{tpu_custom_call.1} parent=1 // pred_check_branch
      %23 = sbr.rel (0) target = $region17
    $region16: #{tpu_custom_call.1} parent=1 // pred_region
      _
    $region17: #{tpu_custom_call.1} parent=1 // pred_fallthru
      _
    // Predicated region
    $region18: #{tpu_custom_call.1} parent=1 // pred_check
      _
    $region19: #{tpu_custom_call.1} parent=1 // pred_check_branch
      %25 = sbr.rel (0) target = $region21
    $region20: #{tpu_custom_call.1} parent=1 // pred_region
      _
    $region21: #{tpu_custom_call.1} parent=1 // pred_fallthru
      _
    // Predicated region
    $region22: #{tpu_custom_call.1} parent=1 // pred_check
      _
    $region23: #{tpu_custom_call.1} parent=1 // pred_check_branch
      %27 = sbr.rel (0) target = $region25
    $region24: #{tpu_custom_call.1} parent=1 // pred_region
      _
    $region25: #{tpu_custom_call.1} parent=1 // pred_fallthru
      _
    // Predicated region
    $region26: #{tpu_custom_call.1} parent=1 // pred_check
      _
    $region27: #{tpu_custom_call.1} parent=1 // pred_check_branch
      %29 = sbr.rel (0) target = $region29
    $region28: #{tpu_custom_call.1} parent=1 // pred_region
      _
    $region29: #{tpu_custom_call.1} parent=1 // pred_fallthru
      _
    // Predicated region
    $region30: #{tpu_custom_call.1} parent=1 // pred_check
      _
    $region31: #{tpu_custom_call.1} parent=1 // pred_check_branch
      %31 = sbr.rel (0) target = $region33
    $region32: #{tpu_custom_call.1} parent=1 // pred_region
      _
    $region33: #{tpu_custom_call.1} parent=1 // pred_fallthru
      _
    // Predicated region
    $region34: #{tpu_custom_call.1} parent=1 // pred_check
      _
    $region35: #{tpu_custom_call.1} parent=1 // pred_check_branch
      %33 = sbr.rel (0) target = $region37
    $region36: #{tpu_custom_call.1} parent=1 // pred_region
      _
    $region37: #{tpu_custom_call.1} parent=1 // pred_fallthru
      _
    // Predicated region
    $region38: #{tpu_custom_call.1} parent=1 // pred_check
      _
    $region39: #{tpu_custom_call.1} parent=1 // pred_check_branch
      %35 = sbr.rel (0) target = $region41
    $region40: #{tpu_custom_call.1} parent=1 // pred_region
      _
    $region41: #{tpu_custom_call.1} parent=1 // pred_fallthru
      _
    %v37 = vld [vmem:[%s0] sm:$0xff]
    %v38 = vld [vmem:[%s0 + $0x8] sm:$0xff]
    %v39 = vld [vmem:[%s0 + $0x10] sm:$0xff]
    %v40 = vld [vmem:[%s0 + $0x18] sm:$0xff]
    %v41 = vld [vmem:[%s0 + $0x20] sm:$0xff]
    %v42 = vld [vmem:[%s0 + $0x28] sm:$0xff]
    %v43 = vld [vmem:[%s0 + $0x30] sm:$0xff]
    %v44 = vld [vmem:[%s0 + $0x38] sm:$0xff]
    %v45 = vld [vmem:[%s0 + $0x40] sm:$0xff]
    %v46 = vld [vmem:[%s0 + $0x48] sm:$0xff]
    %v47 = vld [vmem:[%s0 + $0x50] sm:$0xff]
    %v48 = vld [vmem:[%s0 + $0x58] sm:$0xff]
    %v49 = vld [vmem:[%s0 + $0x60] sm:$0xff]
    %v50 = vld [vmem:[%s0 + $0x68] sm:$0xff]
    %v51 = vld [vmem:[%s0 + $0x70] sm:$0xff]
    %v52 = vld [vmem:[%s0 + $0x78] sm:$0xff]
    %v53 = vpack.c.bf16 %v38, %v37
    %v54 = vpack.c.bf16 %v40, %v39
    %v55 = vpack.c.bf16 %v42, %v41
    %v56 = vpack.c.bf16 %v44, %v43
    %v57 = vpack.c.bf16 %v46, %v45
    %v58 = vpack.c.bf16 %v48, %v47
    %v59 = vpack.c.bf16 %v50, %v49
    %v60 = vpack.c.bf16 %v52, %v51
    %v61 = vld [vmem:[%s2] sm:$0xf]
    %v62 = vld [vmem:[%s2 + $0x4] sm:$0xf]
    %v63 = vld [vmem:[%s2 + $0x8] sm:$0xf]
    %v64 = vld [vmem:[%s2 + $0xc] sm:$0xf]
    %v65 = vld [vmem:[%s3] sm:$0x1]
    %v67 = vlaneseq
    %v68 = vshrl.u32 %v67, 7
    %v69 = vsub.s32 0, %v68
    %v70 = vrot.slane %v65, %v69
    %v76 = vunpack.c.l.b16 %v61
    %v77 = vunpack.c.l.b16 %v62
    %v78 = vunpack.c.l.b16 %v63
    %v79 = vunpack.c.l.b16 %v64
    %v80 = vpack.c.b16 %v77, %v76
    %v81 = vpack.c.b16 %v79, %v78
    %vm84 = vcmask 261120
    %v86 = vsel %vm84, %v53, 0
    %v89 = vsel %vm84, %v54, 0
    %v92 = vsel %vm84, %v55, 0
    %v95 = vsel %vm84, %v56, 0
    %v98 = vsel %vm84, %v57, 0
    %v101 = vsel %vm84, %v58, 0
    %v104 = vsel %vm84, %v59, 0
    %v107 = vsel %vm84, %v60, 0
    %109 = vmatprep.subr.bf16.mxu0 0
    %110 = vmatpush1.bf16.msra.mxu0 %v80
    %111 = vmatprep.subr.bf16.mxu0 0
    %112 = vmatpush1.bf16.msra.mxu0 %v81
    %113 = vmatprep.subr.bf16.mxu0 0
    %114 = vmatpush1.bf16.msra.mxu0 0
    %115 = vmatprep.subr.bf16.mxu0 0
    %116 = vmatpush1.bf16.msra.mxu0 0
    %117 = vmatprep.subr.bf16.mxu0 0
    %118 = vmatpush1.bf16.msra.mxu0 0
    %119 = vmatprep.subr.bf16.mxu0 0
    %120 = vmatpush1.bf16.msra.mxu0 0
    %121 = vmatprep.subr.bf16.mxu0 0
    %122 = vmatpush1.bf16.msra.mxu0 0
    %123 = vmatprep.subr.bf16.mxu0 0
    %124 = vmatpush1.bf16.msra.mxu0 0
    %125 = vmatprep.subr.bf16.mxu0 0
    %126 = vmatpush1.bf16.msra.mxu0 0
    %127 = vmatprep.subr.bf16.mxu0 0
    %128 = vmatpush1.bf16.msra.mxu0 0
    %129 = vmatprep.subr.bf16.mxu0 0
    %130 = vmatpush1.bf16.msra.mxu0 0
    %131 = vmatprep.subr.bf16.mxu0 0
    %132 = vmatpush1.bf16.msra.mxu0 0
    %133 = vmatprep.subr.bf16.mxu0 0
    %134 = vmatpush1.bf16.msra.mxu0 0
    %135 = vmatprep.subr.bf16.mxu0 0
    %136 = vmatpush1.bf16.msra.mxu0 0
    %137 = vmatprep.subr.bf16.mxu0 0
    %138 = vmatpush1.bf16.msra.mxu0 0
    %139 = vmatprep.subr.bf16.mxu0 0
    %140 = vmatpush1.bf16.msra.mxu0 0
    %141 = vmatprep.mubr.bf16.mxu0 0
    %142 = vmatmul.mubr.bf16.gmra.mrb[0].mxu0 %v86
    %v143 = vpop.f32.mrb[0].mxu0
    %v144 = vadd.f32 %v70, %v143
    %v145 = vpop.f32.mrb[0].mxu0
    %v146 = vpop.f32.mrb[0].mxu0
    %v147 = vadd.f32 %v70, %v146
    %v148 = vpop.f32.mrb[0].mxu0
    %149 = vmatprep.mubr.bf16.mxu0 0
    %150 = vmatmul.mubr.bf16.gmra.mrb[0].mxu0 %v89
    %v151 = vpop.f32.mrb[0].mxu0
    %v152 = vadd.f32 %v70, %v151
    %v153 = vpop.f32.mrb[0].mxu0
    %v154 = vpop.f32.mrb[0].mxu0
    %v155 = vadd.f32 %v70, %v154
    %v156 = vpop.f32.mrb[0].mxu0
    %157 = vmatprep.mubr.bf16.mxu0 0
    %158 = vmatmul.mubr.bf16.gmra.mrb[0].mxu0 %v92
    %v159 = vpop.f32.mrb[0].mxu0
    %v160 = vadd.f32 %v70, %v159
    %v161 = vpop.f32.mrb[0].mxu0
    %v162 = vpop.f32.mrb[0].mxu0
    %v163 = vadd.f32 %v70, %v162
    %v164 = vpop.f32.mrb[0].mxu0
    %165 = vmatprep.mubr.bf16.mxu0 0
    %166 = vmatmul.mubr.bf16.gmra.mrb[0].mxu0 %v95
    %v167 = vpop.f32.mrb[0].mxu0
    %v168 = vadd.f32 %v70, %v167
    %v169 = vpop.f32.mrb[0].mxu0
    %v170 = vpop.f32.mrb[0].mxu0
    %v171 = vadd.f32 %v70, %v170
    %v172 = vpop.f32.mrb[0].mxu0
    %173 = vmatprep.mubr.bf16.mxu0 0
    %174 = vmatmul.mubr.bf16.gmra.mrb[0].mxu0 %v98
    %v175 = vpop.f32.mrb[0].mxu0
    %v176 = vadd.f32 %v70, %v175
    %v177 = vpop.f32.mrb[0].mxu0
    %v178 = vpop.f32.mrb[0].mxu0
    %v179 = vadd.f32 %v70, %v178
    %v180 = vpop.f32.mrb[0].mxu0
    %181 = vmatprep.mubr.bf16.mxu0 0
    %182 = vmatmul.mubr.bf16.gmra.mrb[0].mxu0 %v101
    %v183 = vpop.f32.mrb[0].mxu0
    %v184 = vadd.f32 %v70, %v183
    %v185 = vpop.f32.mrb[0].mxu0
    %v186 = vpop.f32.mrb[0].mxu0
    %v187 = vadd.f32 %v70, %v186
    %v188 = vpop.f32.mrb[0].mxu0
    %189 = vmatprep.mubr.bf16.mxu0 0
    %190 = vmatmul.mubr.bf16.gmra.mrb[0].mxu0 %v104
    %v191 = vpop.f32.mrb[0].mxu0
    %v192 = vadd.f32 %v70, %v191
    %v193 = vpop.f32.mrb[0].mxu0
    %v194 = vpop.f32.mrb[0].mxu0
    %v195 = vadd.f32 %v70, %v194
    %v196 = vpop.f32.mrb[0].mxu0
    %197 = vmatprep.mubr.bf16.mxu0 0
    %198 = vmatmul.mubr.bf16.gmra.mrb[0].mxu0 %v107
    %v199 = vpop.f32.mrb[0].mxu0
    %v200 = vadd.f32 %v70, %v199
    %v201 = vpop.f32.mrb[0].mxu0
    %v202 = vpop.f32.mrb[0].mxu0
    %v203 = vadd.f32 %v70, %v202
    %v204 = vpop.f32.mrb[0].mxu0
    %205 = vdwg.mxu0
    %v206 = vmax.f32 %v144, 0.0
    %v207 = vmax.f32 %v147, 0.0
    %v208 = vmax.f32 %v152, 0.0
    %v209 = vmax.f32 %v155, 0.0
    %v210 = vmax.f32 %v160, 0.0
    %v211 = vmax.f32 %v163, 0.0
    %v212 = vmax.f32 %v168, 0.0
    %v213 = vmax.f32 %v171, 0.0
    %v214 = vmax.f32 %v176, 0.0
    %v215 = vmax.f32 %v179, 0.0
    %v216 = vmax.f32 %v184, 0.0
    %v217 = vmax.f32 %v187, 0.0
    %v218 = vmax.f32 %v192, 0.0
    %v219 = vmax.f32 %v195, 0.0
    %v220 = vmax.f32 %v200, 0.0
    %v221 = vmax.f32 %v203, 0.0
    %v222 = vpack.c.bf16 %v207, %v206
    %v223 = vpack.c.bf16 %v209, %v208
    %v224 = vpack.c.bf16 %v211, %v210
    %v225 = vpack.c.bf16 %v213, %v212
    %v226 = vpack.c.bf16 %v215, %v214
    %v227 = vpack.c.bf16 %v217, %v216
    %v228 = vpack.c.bf16 %v219, %v218
    %v229 = vpack.c.bf16 %v221, %v220
    %v230 = vld [vmem:[%s4] sm:$0xf]
    %v231 = vld [vmem:[%s4 + $0x4] sm:$0xf]
    %v232 = vld [vmem:[%s4 + $0x8] sm:$0xf]
    %v233 = vld [vmem:[%s4 + $0xc] sm:$0xf]
    %v234 = vld [vmem:[%s4 + $0x10] sm:$0xf]
    %v235 = vld [vmem:[%s4 + $0x14] sm:$0xf]
    %v236 = vld [vmem:[%s4 + $0x18] sm:$0xf]
    %v237 = vld [vmem:[%s4 + $0x1c] sm:$0xf]
    %v238 = vld [vmem:[%s5] sm:$0x1]
    %v240 = vlaneseq
    %v241 = vshrl.u32 %v240, 7
    %v242 = vsub.s32 0, %v241
    %v243 = vrot.slane %v238, %v242
    %v253 = vunpack.c.l.b16 %v230
    %v254 = vunpack.c.l.b16 %v231
    %v255 = vunpack.c.l.b16 %v232
    %v256 = vunpack.c.l.b16 %v233
    %v257 = vunpack.c.l.b16 %v234
    %v258 = vunpack.c.l.b16 %v235
    %v259 = vunpack.c.l.b16 %v236
    %v260 = vunpack.c.l.b16 %v237
    %v261 = vpack.c.b16 %v254, %v253
    %v262 = vpack.c.b16 %v256, %v255
    %v263 = vpack.c.b16 %v258, %v257
    %v264 = vpack.c.b16 %v260, %v259
    %vm269 = vcmask 523264
    %v271 = vsel %vm269, %v222, 0
    %v274 = vsel %vm269, %v223, 0
    %v277 = vsel %vm269, %v224, 0
    %v280 = vsel %vm269, %v225, 0
    %v283 = vsel %vm269, %v226, 0
    %v286 = vsel %vm269, %v227, 0
    %v289 = vsel %vm269, %v228, 0
    %v292 = vsel %vm269, %v229, 0
    %294 = vmatprep.subr.bf16.mxu0 0
    %295 = vmatpush1.bf16.msra.mxu0 %v261
    %296 = vmatprep.subr.bf16.mxu0 0
    %297 = vmatpush1.bf16.msra.mxu0 %v262
    %298 = vmatprep.subr.bf16.mxu0 0
    %299 = vmatpush1.bf16.msra.mxu0 %v263
    %300 = vmatprep.subr.bf16.mxu0 0
    %301 = vmatpush1.bf16.msra.mxu0 %v264
    %302 = vmatprep.subr.bf16.mxu0 0
    %303 = vmatpush1.bf16.msra.mxu0 0
    %304 = vmatprep.subr.bf16.mxu0 0
    %305 = vmatpush1.bf16.msra.mxu0 0
    %306 = vmatprep.subr.bf16.mxu0 0
    %307 = vmatpush1.bf16.msra.mxu0 0
    %308 = vmatprep.subr.bf16.mxu0 0
    %309 = vmatpush1.bf16.msra.mxu0 0
    %310 = vmatprep.subr.bf16.mxu0 0
    %311 = vmatpush1.bf16.msra.mxu0 0
    %312 = vmatprep.subr.bf16.mxu0 0
    %313 = vmatpush1.bf16.msra.mxu0 0
    %314 = vmatprep.subr.bf16.mxu0 0
    %315 = vmatpush1.bf16.msra.mxu0 0
    %316 = vmatprep.subr.bf16.mxu0 0
    %317 = vmatpush1.bf16.msra.mxu0 0
    %318 = vmatprep.subr.bf16.mxu0 0
    %319 = vmatpush1.bf16.msra.mxu0 0
    %320 = vmatprep.subr.bf16.mxu0 0
    %321 = vmatpush1.bf16.msra.mxu0 0
    %322 = vmatprep.subr.bf16.mxu0 0
    %323 = vmatpush1.bf16.msra.mxu0 0
    %324 = vmatprep.subr.bf16.mxu0 0
    %325 = vmatpush1.bf16.msra.mxu0 0
    %326 = vmatprep.mubr.bf16.mxu0 0
    %327 = vmatmul.mubr.bf16.gmra.mrb[0].mxu0 %v271
    %v328 = vpop.f32.mrb[0].mxu0
    %v329 = vadd.f32 %v243, %v328
    %v330 = vpop.f32.mrb[0].mxu0
    %v331 = vpop.f32.mrb[0].mxu0
    %v332 = vadd.f32 %v243, %v331
    %v333 = vpop.f32.mrb[0].mxu0
    %334 = vmatprep.mubr.bf16.mxu0 0
    %335 = vmatmul.mubr.bf16.gmra.mrb[0].mxu0 %v274
    %v336 = vpop.f32.mrb[0].mxu0
    %v337 = vadd.f32 %v243, %v336
    %v338 = vpop.f32.mrb[0].mxu0
    %v339 = vpop.f32.mrb[0].mxu0
    %v340 = vadd.f32 %v243, %v339
    %v341 = vpop.f32.mrb[0].mxu0
    %342 = vmatprep.mubr.bf16.mxu0 0
    %343 = vmatmul.mubr.bf16.gmra.mrb[0].mxu0 %v277
    %v344 = vpop.f32.mrb[0].mxu0
    %v345 = vadd.f32 %v243, %v344
    %v346 = vpop.f32.mrb[0].mxu0
    %v347 = vpop.f32.mrb[0].mxu0
    %v348 = vadd.f32 %v243, %v347
    %v349 = vpop.f32.mrb[0].mxu0
    %350 = vmatprep.mubr.bf16.mxu0 0
    %351 = vmatmul.mubr.bf16.gmra.mrb[0].mxu0 %v280
    %v352 = vpop.f32.mrb[0].mxu0
    %v353 = vadd.f32 %v243, %v352
    %v354 = vpop.f32.mrb[0].mxu0
    %v355 = vpop.f32.mrb[0].mxu0
    %v356 = vadd.f32 %v243, %v355
    %v357 = vpop.f32.mrb[0].mxu0
    %358 = vmatprep.mubr.bf16.mxu0 0
    %359 = vmatmul.mubr.bf16.gmra.mrb[0].mxu0 %v283
    %v360 = vpop.f32.mrb[0].mxu0
    %v361 = vadd.f32 %v243, %v360
    %v362 = vpop.f32.mrb[0].mxu0
    %v363 = vpop.f32.mrb[0].mxu0
    %v364 = vadd.f32 %v243, %v363
    %v365 = vpop.f32.mrb[0].mxu0
    %366 = vmatprep.mubr.bf16.mxu0 0
    %367 = vmatmul.mubr.bf16.gmra.mrb[0].mxu0 %v286
    %v368 = vpop.f32.mrb[0].mxu0
    %v369 = vadd.f32 %v243, %v368
    %v370 = vpop.f32.mrb[0].mxu0
    %v371 = vpop.f32.mrb[0].mxu0
    %v372 = vadd.f32 %v243, %v371
    %v373 = vpop.f32.mrb[0].mxu0
    %374 = vmatprep.mubr.bf16.mxu0 0
    %375 = vmatmul.mubr.bf16.gmra.mrb[0].mxu0 %v289
    %v376 = vpop.f32.mrb[0].mxu0
    %v377 = vadd.f32 %v243, %v376
    %v378 = vpop.f32.mrb[0].mxu0
    %v379 = vpop.f32.mrb[0].mxu0
    %v380 = vadd.f32 %v243, %v379
    %v381 = vpop.f32.mrb[0].mxu0
    %382 = vmatprep.mubr.bf16.mxu0 0
    %383 = vmatmul.mubr.bf16.gmra.mrb[0].mxu0 %v292
    %v384 = vpop.f32.mrb[0].mxu0
    %v385 = vadd.f32 %v243, %v384
    %v386 = vpop.f32.mrb[0].mxu0
    %v387 = vpop.f32.mrb[0].mxu0
    %v388 = vadd.f32 %v243, %v387
    %v389 = vpop.f32.mrb[0].mxu0
    %390 = vdwg.mxu0
    %v391 = vmax.f32 %v329, 0.0
    %v392 = vmax.f32 %v332, 0.0
    %v393 = vmax.f32 %v337, 0.0
    %v394 = vmax.f32 %v340, 0.0
    %v395 = vmax.f32 %v345, 0.0
    %v396 = vmax.f32 %v348, 0.0
    %v397 = vmax.f32 %v353, 0.0
    %v398 = vmax.f32 %v356, 0.0
    %v399 = vmax.f32 %v361, 0.0
    %v400 = vmax.f32 %v364, 0.0
    %v401 = vmax.f32 %v369, 0.0
    %v402 = vmax.f32 %v372, 0.0
    %v403 = vmax.f32 %v377, 0.0
    %v404 = vmax.f32 %v380, 0.0
    %v405 = vmax.f32 %v385, 0.0
    %v406 = vmax.f32 %v388, 0.0
    %v407 = vpack.c.bf16 %v392, %v391
    %v408 = vpack.c.bf16 %v394, %v393
    %v409 = vpack.c.bf16 %v396, %v395
    %v410 = vpack.c.bf16 %v398, %v397
    %v411 = vpack.c.bf16 %v400, %v399
    %v412 = vpack.c.bf16 %v402, %v401
    %v413 = vpack.c.bf16 %v404, %v403
    %v414 = vpack.c.bf16 %v406, %v405
    %v415 = vld [vmem:[%s6] sm:$0xf]
    %v416 = vld [vmem:[%s6 + $0x4] sm:$0xf]
    %v417 = vld [vmem:[%s6 + $0x8] sm:$0xf]
    %v418 = vld [vmem:[%s6 + $0xc] sm:$0xf]
    %v419 = vld [vmem:[%s6 + $0x10] sm:$0xf]
    %v420 = vld [vmem:[%s6 + $0x14] sm:$0xf]
    %v421 = vld [vmem:[%s6 + $0x18] sm:$0xf]
    %v422 = vld [vmem:[%s6 + $0x1c] sm:$0xf]
    %v423 = vld [vmem:[%s7] sm:$0x1]
    %v425 = vlaneseq
    %v426 = vshrl.u32 %v425, 7
    %v427 = vsub.s32 0, %v426
    %v428 = vrot.slane %v423, %v427
    %v438 = vunpack.c.l.b16 %v415
    %v439 = vunpack.c.l.b16 %v416
    %v440 = vunpack.c.l.b16 %v417
    %v441 = vunpack.c.l.b16 %v418
    %v442 = vunpack.c.l.b16 %v419
    %v443 = vunpack.c.l.b16 %v420
    %v444 = vunpack.c.l.b16 %v421
    %v445 = vunpack.c.l.b16 %v422
    %v446 = vpack.c.b16 %v439, %v438
    %v447 = vpack.c.b16 %v441, %v440
    %v448 = vpack.c.b16 %v443, %v442
    %v449 = vpack.c.b16 %v445, %v444
    %v455 = vsel %vm269, %v407, 0
    %v458 = vsel %vm269, %v408, 0
    %v461 = vsel %vm269, %v409, 0
    %v464 = vsel %vm269, %v410, 0
    %v467 = vsel %vm269, %v411, 0
    %v470 = vsel %vm269, %v412, 0
    %v473 = vsel %vm269, %v413, 0
    %v476 = vsel %vm269, %v414, 0
    %478 = vmatprep.subr.bf16.mxu0 0
    %479 = vmatpush1.bf16.msra.mxu0 %v446
    %480 = vmatprep.subr.bf16.mxu0 0
    %481 = vmatpush1.bf16.msra.mxu0 %v447
    %482 = vmatprep.subr.bf16.mxu0 0
    %483 = vmatpush1.bf16.msra.mxu0 %v448
    %484 = vmatprep.subr.bf16.mxu0 0
    %485 = vmatpush1.bf16.msra.mxu0 %v449
    %486 = vmatprep.subr.bf16.mxu0 0
    %487 = vmatpush1.bf16.msra.mxu0 0
    %488 = vmatprep.subr.bf16.mxu0 0
    %489 = vmatpush1.bf16.msra.mxu0 0
    %490 = vmatprep.subr.bf16.mxu0 0
    %491 = vmatpush1.bf16.msra.mxu0 0
    %492 = vmatprep.subr.bf16.mxu0 0
    %493 = vmatpush1.bf16.msra.mxu0 0
    %494 = vmatprep.subr.bf16.mxu0 0
    %495 = vmatpush1.bf16.msra.mxu0 0
    %496 = vmatprep.subr.bf16.mxu0 0
    %497 = vmatpush1.bf16.msra.mxu0 0
    %498 = vmatprep.subr.bf16.mxu0 0
    %499 = vmatpush1.bf16.msra.mxu0 0
    %500 = vmatprep.subr.bf16.mxu0 0
    %501 = vmatpush1.bf16.msra.mxu0 0
    %502 = vmatprep.subr.bf16.mxu0 0
    %503 = vmatpush1.bf16.msra.mxu0 0
    %504 = vmatprep.subr.bf16.mxu0 0
    %505 = vmatpush1.bf16.msra.mxu0 0
    %506 = vmatprep.subr.bf16.mxu0 0
    %507 = vmatpush1.bf16.msra.mxu0 0
    %508 = vmatprep.subr.bf16.mxu0 0
    %509 = vmatpush1.bf16.msra.mxu0 0
    %510 = vmatprep.mubr.bf16.mxu0 0
    %511 = vmatmul.mubr.bf16.gmra.mrb[0].mxu0 %v455
    %v512 = vpop.f32.mrb[0].mxu0
    %v513 = vadd.f32 %v428, %v512
    %v514 = vpop.f32.mrb[0].mxu0
    %v515 = vpop.f32.mrb[0].mxu0
    %v516 = vadd.f32 %v428, %v515
    %v517 = vpop.f32.mrb[0].mxu0
    %518 = vmatprep.mubr.bf16.mxu0 0
    %519 = vmatmul.mubr.bf16.gmra.mrb[0].mxu0 %v458
    %v520 = vpop.f32.mrb[0].mxu0
    %v521 = vadd.f32 %v428, %v520
    %v522 = vpop.f32.mrb[0].mxu0
    %v523 = vpop.f32.mrb[0].mxu0
    %v524 = vadd.f32 %v428, %v523
    %v525 = vpop.f32.mrb[0].mxu0
    %526 = vmatprep.mubr.bf16.mxu0 0
    %527 = vmatmul.mubr.bf16.gmra.mrb[0].mxu0 %v461
    %v528 = vpop.f32.mrb[0].mxu0
    %v529 = vadd.f32 %v428, %v528
    %v530 = vpop.f32.mrb[0].mxu0
    %v531 = vpop.f32.mrb[0].mxu0
    %v532 = vadd.f32 %v428, %v531
    %v533 = vpop.f32.mrb[0].mxu0
    %534 = vmatprep.mubr.bf16.mxu0 0
    %535 = vmatmul.mubr.bf16.gmra.mrb[0].mxu0 %v464
    %v536 = vpop.f32.mrb[0].mxu0
    %v537 = vadd.f32 %v428, %v536
    %v538 = vpop.f32.mrb[0].mxu0
    %v539 = vpop.f32.mrb[0].mxu0
    %v540 = vadd.f32 %v428, %v539
    %v541 = vpop.f32.mrb[0].mxu0
    %542 = vmatprep.mubr.bf16.mxu0 0
    %543 = vmatmul.mubr.bf16.gmra.mrb[0].mxu0 %v467
    %v544 = vpop.f32.mrb[0].mxu0
    %v545 = vadd.f32 %v428, %v544
    %v546 = vpop.f32.mrb[0].mxu0
    %v547 = vpop.f32.mrb[0].mxu0
    %v548 = vadd.f32 %v428, %v547
    %v549 = vpop.f32.mrb[0].mxu0
    %550 = vmatprep.mubr.bf16.mxu0 0
    %551 = vmatmul.mubr.bf16.gmra.mrb[0].mxu0 %v470
    %v552 = vpop.f32.mrb[0].mxu0
    %v553 = vadd.f32 %v428, %v552
    %v554 = vpop.f32.mrb[0].mxu0
    %v555 = vpop.f32.mrb[0].mxu0
    %v556 = vadd.f32 %v428, %v555
    %v557 = vpop.f32.mrb[0].mxu0
    %558 = vmatprep.mubr.bf16.mxu0 0
    %559 = vmatmul.mubr.bf16.gmra.mrb[0].mxu0 %v473
    %v560 = vpop.f32.mrb[0].mxu0
    %v561 = vadd.f32 %v428, %v560
    %v562 = vpop.f32.mrb[0].mxu0
    %v563 = vpop.f32.mrb[0].mxu0
    %v564 = vadd.f32 %v428, %v563
    %v565 = vpop.f32.mrb[0].mxu0
    %566 = vmatprep.mubr.bf16.mxu0 0
    %567 = vmatmul.mubr.bf16.gmra.mrb[0].mxu0 %v476
    %v568 = vpop.f32.mrb[0].mxu0
    %v569 = vadd.f32 %v428, %v568
    %v570 = vpop.f32.mrb[0].mxu0
    %v571 = vpop.f32.mrb[0].mxu0
    %v572 = vadd.f32 %v428, %v571
    %v573 = vpop.f32.mrb[0].mxu0
    %574 = vdwg.mxu0
    %v575 = vmax.f32 %v513, 0.0
    %v576 = vmax.f32 %v516, 0.0
    %v577 = vmax.f32 %v521, 0.0
    %v578 = vmax.f32 %v524, 0.0
    %v579 = vmax.f32 %v529, 0.0
    %v580 = vmax.f32 %v532, 0.0
    %v581 = vmax.f32 %v537, 0.0
    %v582 = vmax.f32 %v540, 0.0
    %v583 = vmax.f32 %v545, 0.0
    %v584 = vmax.f32 %v548, 0.0
    %v585 = vmax.f32 %v553, 0.0
    %v586 = vmax.f32 %v556, 0.0
    %v587 = vmax.f32 %v561, 0.0
    %v588 = vmax.f32 %v564, 0.0
    %v589 = vmax.f32 %v569, 0.0
    %v590 = vmax.f32 %v572, 0.0
    %v591 = vpack.c.bf16 %v576, %v575
    %v592 = vpack.c.bf16 %v578, %v577
    %v593 = vpack.c.bf16 %v580, %v579
    %v594 = vpack.c.bf16 %v582, %v581
    %v595 = vpack.c.bf16 %v584, %v583
    %v596 = vpack.c.bf16 %v586, %v585
    %v597 = vpack.c.bf16 %v588, %v587
    %v598 = vpack.c.bf16 %v590, %v589
    %v599 = vld [vmem:[%s8] sm:$0xf]
    %v600 = vld [vmem:[%s8 + $0x4] sm:$0xf]
    %v601 = vld [vmem:[%s8 + $0x8] sm:$0xf]
    %v602 = vld [vmem:[%s8 + $0xc] sm:$0xf]
    %v603 = vld [vmem:[%s8 + $0x10] sm:$0xf]
    %v604 = vld [vmem:[%s8 + $0x14] sm:$0xf]
    %v605 = vld [vmem:[%s8 + $0x18] sm:$0xf]
    %v606 = vld [vmem:[%s8 + $0x1c] sm:$0xf]
    %v607 = vld [vmem:[%s9] sm:$0x1]
    %v609 = vlaneseq
    %v610 = vshrl.u32 %v609, 7
    %v611 = vsub.s32 0, %v610
    %v612 = vrot.slane %v607, %v611
    %v622 = vunpack.c.l.b16 %v599
    %v623 = vunpack.c.l.b16 %v600
    %v624 = vunpack.c.l.b16 %v601
    %v625 = vunpack.c.l.b16 %v602
    %v626 = vunpack.c.l.b16 %v603
    %v627 = vunpack.c.l.b16 %v604
    %v628 = vunpack.c.l.b16 %v605
    %v629 = vunpack.c.l.b16 %v606
    %v630 = vpack.c.b16 %v623, %v622
    %v631 = vpack.c.b16 %v625, %v624
    %v632 = vpack.c.b16 %v627, %v626
    %v633 = vpack.c.b16 %v629, %v628
    %v639 = vsel %vm269, %v591, 0
    %v642 = vsel %vm269, %v592, 0
    %v645 = vsel %vm269, %v593, 0
    %v648 = vsel %vm269, %v594, 0
    %v651 = vsel %vm269, %v595, 0
    %v654 = vsel %vm269, %v596, 0
    %v657 = vsel %vm269, %v597, 0
    %v660 = vsel %vm269, %v598, 0
    %662 = vmatprep.subr.bf16.mxu0 0
    %663 = vmatpush1.bf16.msra.mxu0 %v630
    %664 = vmatprep.subr.bf16.mxu0 0
    %665 = vmatpush1.bf16.msra.mxu0 %v631
    %666 = vmatprep.subr.bf16.mxu0 0
    %667 = vmatpush1.bf16.msra.mxu0 %v632
    %668 = vmatprep.subr.bf16.mxu0 0
    %669 = vmatpush1.bf16.msra.mxu0 %v633
    %670 = vmatprep.subr.bf16.mxu0 0
    %671 = vmatpush1.bf16.msra.mxu0 0
    %672 = vmatprep.subr.bf16.mxu0 0
    %673 = vmatpush1.bf16.msra.mxu0 0
    %674 = vmatprep.subr.bf16.mxu0 0
    %675 = vmatpush1.bf16.msra.mxu0 0
    %676 = vmatprep.subr.bf16.mxu0 0
    %677 = vmatpush1.bf16.msra.mxu0 0
    %678 = vmatprep.subr.bf16.mxu0 0
    %679 = vmatpush1.bf16.msra.mxu0 0
    %680 = vmatprep.subr.bf16.mxu0 0
    %681 = vmatpush1.bf16.msra.mxu0 0
    %682 = vmatprep.subr.bf16.mxu0 0
    %683 = vmatpush1.bf16.msra.mxu0 0
    %684 = vmatprep.subr.bf16.mxu0 0
    %685 = vmatpush1.bf16.msra.mxu0 0
    %686 = vmatprep.subr.bf16.mxu0 0
    %687 = vmatpush1.bf16.msra.mxu0 0
    %688 = vmatprep.subr.bf16.mxu0 0
    %689 = vmatpush1.bf16.msra.mxu0 0
    %690 = vmatprep.subr.bf16.mxu0 0
    %691 = vmatpush1.bf16.msra.mxu0 0
    %692 = vmatprep.subr.bf16.mxu0 0
    %693 = vmatpush1.bf16.msra.mxu0 0
    %694 = vmatprep.mubr.bf16.mxu0 0
    %695 = vmatmul.mubr.bf16.gmra.mrb[0].mxu0 %v639
    %v696 = vpop.f32.mrb[0].mxu0
    %v697 = vadd.f32 %v612, %v696
    %v698 = vpop.f32.mrb[0].mxu0
    %v699 = vpop.f32.mrb[0].mxu0
    %v700 = vadd.f32 %v612, %v699
    %v701 = vpop.f32.mrb[0].mxu0
    %702 = vmatprep.mubr.bf16.mxu0 0
    %703 = vmatmul.mubr.bf16.gmra.mrb[0].mxu0 %v642
    %v704 = vpop.f32.mrb[0].mxu0
    %v705 = vadd.f32 %v612, %v704
    %v706 = vpop.f32.mrb[0].mxu0
    %v707 = vpop.f32.mrb[0].mxu0
    %v708 = vadd.f32 %v612, %v707
    %v709 = vpop.f32.mrb[0].mxu0
    %710 = vmatprep.mubr.bf16.mxu0 0
    %711 = vmatmul.mubr.bf16.gmra.mrb[0].mxu0 %v645
    %v712 = vpop.f32.mrb[0].mxu0
    %v713 = vadd.f32 %v612, %v712
    %v714 = vpop.f32.mrb[0].mxu0
    %v715 = vpop.f32.mrb[0].mxu0
    %v716 = vadd.f32 %v612, %v715
    %v717 = vpop.f32.mrb[0].mxu0
    %718 = vmatprep.mubr.bf16.mxu0 0
    %719 = vmatmul.mubr.bf16.gmra.mrb[0].mxu0 %v648
    %v720 = vpop.f32.mrb[0].mxu0
    %v721 = vadd.f32 %v612, %v720
    %v722 = vpop.f32.mrb[0].mxu0
    %v723 = vpop.f32.mrb[0].mxu0
    %v724 = vadd.f32 %v612, %v723
    %v725 = vpop.f32.mrb[0].mxu0
    %726 = vmatprep.mubr.bf16.mxu0 0
    %727 = vmatmul.mubr.bf16.gmra.mrb[0].mxu0 %v651
    %v728 = vpop.f32.mrb[0].mxu0
    %v729 = vadd.f32 %v612, %v728
    %v730 = vpop.f32.mrb[0].mxu0
    %v731 = vpop.f32.mrb[0].mxu0
    %v732 = vadd.f32 %v612, %v731
    %v733 = vpop.f32.mrb[0].mxu0
    %734 = vmatprep.mubr.bf16.mxu0 0
    %735 = vmatmul.mubr.bf16.gmra.mrb[0].mxu0 %v654
    %v736 = vpop.f32.mrb[0].mxu0
    %v737 = vadd.f32 %v612, %v736
    %v738 = vpop.f32.mrb[0].mxu0
    %v739 = vpop.f32.mrb[0].mxu0
    %v740 = vadd.f32 %v612, %v739
    %v741 = vpop.f32.mrb[0].mxu0
    %742 = vmatprep.mubr.bf16.mxu0 0
    %743 = vmatmul.mubr.bf16.gmra.mrb[0].mxu0 %v657
    %v744 = vpop.f32.mrb[0].mxu0
    %v745 = vadd.f32 %v612, %v744
    %v746 = vpop.f32.mrb[0].mxu0
    %v747 = vpop.f32.mrb[0].mxu0
    %v748 = vadd.f32 %v612, %v747
    %v749 = vpop.f32.mrb[0].mxu0
    %750 = vmatprep.mubr.bf16.mxu0 0
    %751 = vmatmul.mubr.bf16.gmra.mrb[0].mxu0 %v660
    %v752 = vpop.f32.mrb[0].mxu0
    %v753 = vadd.f32 %v612, %v752
    %v754 = vpop.f32.mrb[0].mxu0
    %v755 = vpop.f32.mrb[0].mxu0
    %v756 = vadd.f32 %v612, %v755
    %v757 = vpop.f32.mrb[0].mxu0
    %758 = vdwg.mxu0
    %v759 = vmul.f32 %v697, 0.1
    %v760 = vmul.f32 %v700, 0.1
    %v761 = vmul.f32 %v705, 0.1
    %v762 = vmul.f32 %v708, 0.1
    %v763 = vmul.f32 %v713, 0.1
    %v764 = vmul.f32 %v716, 0.1
    %v765 = vmul.f32 %v721, 0.1
    %v766 = vmul.f32 %v724, 0.1
    %v767 = vmul.f32 %v729, 0.1
    %v768 = vmul.f32 %v732, 0.1
    %v769 = vmul.f32 %v737, 0.1
    %v770 = vmul.f32 %v740, 0.1
    %v771 = vmul.f32 %v745, 0.1
    %v772 = vmul.f32 %v748, 0.1
    %v773 = vmul.f32 %v753, 0.1
    %v774 = vmul.f32 %v756, 0.1
    %vm775 = vcmask 31744
    %v776 = vsel %vm775, %v759, -inf
    %777 = vmax.xlane.f32.xlu0 %v776
    %v778 = vpop.xlane.xlu0 %777
    %v779 = vsel %vm775, %v760, -inf
    %780 = vmax.xlane.f32.xlu0 %v779
    %v781 = vpop.xlane.xlu0 %780
    %v782 = vsel %vm775, %v761, -inf
    %783 = vmax.xlane.f32.xlu0 %v782
    %v784 = vpop.xlane.xlu0 %783
    %v785 = vsel %vm775, %v762, -inf
    %786 = vmax.xlane.f32.xlu0 %v785
    %v787 = vpop.xlane.xlu0 %786
    %v788 = vsel %vm775, %v763, -inf
    %789 = vmax.xlane.f32.xlu0 %v788
    %v790 = vpop.xlane.xlu0 %789
    %v791 = vsel %vm775, %v764, -inf
    %792 = vmax.xlane.f32.xlu0 %v791
    %v793 = vpop.xlane.xlu0 %792
    %v794 = vsel %vm775, %v765, -inf
    %795 = vmax.xlane.f32.xlu0 %v794
    %v796 = vpop.xlane.xlu0 %795
    %v797 = vsel %vm775, %v766, -inf
    %798 = vmax.xlane.f32.xlu0 %v797
    %v799 = vpop.xlane.xlu0 %798
    %v800 = vsel %vm775, %v767, -inf
    %801 = vmax.xlane.f32.xlu0 %v800
    %v802 = vpop.xlane.xlu0 %801
    %v803 = vsel %vm775, %v768, -inf
    %804 = vmax.xlane.f32.xlu0 %v803
    %v805 = vpop.xlane.xlu0 %804
    %v806 = vsel %vm775, %v769, -inf
    %807 = vmax.xlane.f32.xlu0 %v806
    %v808 = vpop.xlane.xlu0 %807
    %v809 = vsel %vm775, %v770, -inf
    %810 = vmax.xlane.f32.xlu0 %v809
    %v811 = vpop.xlane.xlu0 %810
    %v812 = vsel %vm775, %v771, -inf
    %813 = vmax.xlane.f32.xlu0 %v812
    %v814 = vpop.xlane.xlu0 %813
    %v815 = vsel %vm775, %v772, -inf
    %816 = vmax.xlane.f32.xlu0 %v815
    %v817 = vpop.xlane.xlu0 %816
    %v818 = vsel %vm775, %v773, -inf
    %819 = vmax.xlane.f32.xlu0 %v818
    %v820 = vpop.xlane.xlu0 %819
    %v821 = vsel %vm775, %v774, -inf
    %822 = vmax.xlane.f32.xlu0 %v821
    %v823 = vpop.xlane.xlu0 %822
    %v824 = vsub.f32 %v759, %v778
    %v825 = vsub.f32 %v760, %v781
    %v826 = vsub.f32 %v761, %v784
    %v827 = vsub.f32 %v762, %v787
    %v828 = vsub.f32 %v763, %v790
    %v829 = vsub.f32 %v764, %v793
    %v830 = vsub.f32 %v765, %v796
    %v831 = vsub.f32 %v766, %v799
    %v832 = vsub.f32 %v767, %v802
    %v833 = vsub.f32 %v768, %v805
    %v834 = vsub.f32 %v769, %v808
    %v835 = vsub.f32 %v770, %v811
    %v836 = vsub.f32 %v771, %v814
    %v837 = vsub.f32 %v772, %v817
    %v838 = vsub.f32 %v773, %v820
    %v839 = vsub.f32 %v774, %v823
    %v840 = vmul.f32 %v824, 1.442695
    %v841 = vpow.pop %v840
    %v842 = vmul.f32 %v825, 1.442695
    %v843 = vpow.pop %v842
    %v844 = vmul.f32 %v826, 1.442695
    %v845 = vpow.pop %v844
    %v846 = vmul.f32 %v827, 1.442695
    %v847 = vpow.pop %v846
    %v848 = vmul.f32 %v828, 1.442695
    %v849 = vpow.pop %v848
    %v850 = vmul.f32 %v829, 1.442695
    %v851 = vpow.pop %v850
    %v852 = vmul.f32 %v830, 1.442695
    %v853 = vpow.pop %v852
    %v854 = vmul.f32 %v831, 1.442695
    %v855 = vpow.pop %v854
    %v856 = vmul.f32 %v832, 1.442695
    %v857 = vpow.pop %v856
    %v858 = vmul.f32 %v833, 1.442695
    %v859 = vpow.pop %v858
    %v860 = vmul.f32 %v834, 1.442695
    %v861 = vpow.pop %v860
    %v862 = vmul.f32 %v835, 1.442695
    %v863 = vpow.pop %v862
    %v864 = vmul.f32 %v836, 1.442695
    %v865 = vpow.pop %v864
    %v866 = vmul.f32 %v837, 1.442695
    %v867 = vpow.pop %v866
    %v868 = vmul.f32 %v838, 1.442695
    %v869 = vpow.pop %v868
    %v870 = vmul.f32 %v839, 1.442695
    %v871 = vpow.pop %v870
    %v872 = vld [vmem:[%s1] sm:$0xff]
    %v873 = vld [vmem:[%s1 + $0x8] sm:$0xff]
    %v874 = vld [vmem:[%s1 + $0x10] sm:$0xff]
    %v875 = vld [vmem:[%s1 + $0x18] sm:$0xff]
    %v876 = vld [vmem:[%s1 + $0x20] sm:$0xff]
    %v877 = vld [vmem:[%s1 + $0x28] sm:$0xff]
    %v878 = vld [vmem:[%s1 + $0x30] sm:$0xff]
    %v879 = vld [vmem:[%s1 + $0x38] sm:$0xff]
    %v880 = vld [vmem:[%s1 + $0x40] sm:$0xff]
    %v881 = vld [vmem:[%s1 + $0x48] sm:$0xff]
    %v882 = vld [vmem:[%s1 + $0x50] sm:$0xff]
    %v883 = vld [vmem:[%s1 + $0x58] sm:$0xff]
    %v884 = vld [vmem:[%s1 + $0x60] sm:$0xff]
    %v885 = vld [vmem:[%s1 + $0x68] sm:$0xff]
    %v886 = vld [vmem:[%s1 + $0x70] sm:$0xff]
    %v887 = vld [vmem:[%s1 + $0x78] sm:$0xff]
    %v888 = vmul.f32 %v872, %v841
    %v889 = vmul.f32 %v873, %v843
    %v890 = vmul.f32 %v874, %v845
    %v891 = vmul.f32 %v875, %v847
    %v892 = vmul.f32 %v876, %v849
    %v893 = vmul.f32 %v877, %v851
    %v894 = vmul.f32 %v878, %v853
    %v895 = vmul.f32 %v879, %v855
    %v896 = vmul.f32 %v880, %v857
    %v897 = vmul.f32 %v881, %v859
    %v898 = vmul.f32 %v882, %v861
    %v899 = vmul.f32 %v883, %v863
    %v900 = vmul.f32 %v884, %v865
    %v901 = vmul.f32 %v885, %v867
    %v902 = vmul.f32 %v886, %v869
    %v903 = vmul.f32 %v887, %v871
    %v904 = vsel %vm775, %v888, 0.0
    %905 = vadd.xlane.f32.xlu0 %v904
    %v906 = vpop.xlane.xlu0 %905
    %v907 = vsel %vm775, %v889, 0.0
    %908 = vadd.xlane.f32.xlu0 %v907
    %v909 = vpop.xlane.xlu0 %908
    %v910 = vsel %vm775, %v890, 0.0
    %911 = vadd.xlane.f32.xlu0 %v910
    %v912 = vpop.xlane.xlu0 %911
    %v913 = vsel %vm775, %v891, 0.0
    %914 = vadd.xlane.f32.xlu0 %v913
    %v915 = vpop.xlane.xlu0 %914
    %v916 = vsel %vm775, %v892, 0.0
    %917 = vadd.xlane.f32.xlu0 %v916
    %v918 = vpop.xlane.xlu0 %917
    %v919 = vsel %vm775, %v893, 0.0
    %920 = vadd.xlane.f32.xlu0 %v919
    %v921 = vpop.xlane.xlu0 %920
    %v922 = vsel %vm775, %v894, 0.0
    %923 = vadd.xlane.f32.xlu0 %v922
    %v924 = vpop.xlane.xlu0 %923
    %v925 = vsel %vm775, %v895, 0.0
    %926 = vadd.xlane.f32.xlu0 %v925
    %v927 = vpop.xlane.xlu0 %926
    %v928 = vsel %vm775, %v896, 0.0
    %929 = vadd.xlane.f32.xlu0 %v928
    %v930 = vpop.xlane.xlu0 %929
    %v931 = vsel %vm775, %v897, 0.0
    %932 = vadd.xlane.f32.xlu0 %v931
    %v933 = vpop.xlane.xlu0 %932
    %v934 = vsel %vm775, %v898, 0.0
    %935 = vadd.xlane.f32.xlu0 %v934
    %v936 = vpop.xlane.xlu0 %935
    %v937 = vsel %vm775, %v899, 0.0
    %938 = vadd.xlane.f32.xlu0 %v937
    %v939 = vpop.xlane.xlu0 %938
    %v940 = vsel %vm775, %v900, 0.0
    %941 = vadd.xlane.f32.xlu0 %v940
    %v942 = vpop.xlane.xlu0 %941
    %v943 = vsel %vm775, %v901, 0.0
    %944 = vadd.xlane.f32.xlu0 %v943
    %v945 = vpop.xlane.xlu0 %944
    %v946 = vsel %vm775, %v902, 0.0
    %947 = vadd.xlane.f32.xlu0 %v946
    %v948 = vpop.xlane.xlu0 %947
    %v949 = vsel %vm775, %v903, 0.0
    %950 = vadd.xlane.f32.xlu0 %v949
    %v951 = vpop.xlane.xlu0 %950
    %v952 = vsel %vm775, %v841, 0.0
    %953 = vadd.xlane.f32.xlu0 %v952
    %v954 = vpop.xlane.xlu0 %953
    %v955 = vsel %vm775, %v843, 0.0
    %956 = vadd.xlane.f32.xlu0 %v955
    %v957 = vpop.xlane.xlu0 %956
    %v958 = vsel %vm775, %v845, 0.0
    %959 = vadd.xlane.f32.xlu0 %v958
    %v960 = vpop.xlane.xlu0 %959
    %v961 = vsel %vm775, %v847, 0.0
    %962 = vadd.xlane.f32.xlu0 %v961
    %v963 = vpop.xlane.xlu0 %962
    %v964 = vsel %vm775, %v849, 0.0
    %965 = vadd.xlane.f32.xlu0 %v964
    %v966 = vpop.xlane.xlu0 %965
    %v967 = vsel %vm775, %v851, 0.0
    %968 = vadd.xlane.f32.xlu0 %v967
    %v969 = vpop.xlane.xlu0 %968
    %v970 = vsel %vm775, %v853, 0.0
    %971 = vadd.xlane.f32.xlu0 %v970
    %v972 = vpop.xlane.xlu0 %971
    %v973 = vsel %vm775, %v855, 0.0
    %974 = vadd.xlane.f32.xlu0 %v973
    %v975 = vpop.xlane.xlu0 %974
    %v976 = vsel %vm775, %v857, 0.0
    %977 = vadd.xlane.f32.xlu0 %v976
    %v978 = vpop.xlane.xlu0 %977
    %v979 = vsel %vm775, %v859, 0.0
    %980 = vadd.xlane.f32.xlu0 %v979
    %v981 = vpop.xlane.xlu0 %980
    %v982 = vsel %vm775, %v861, 0.0
    %983 = vadd.xlane.f32.xlu0 %v982
    %v984 = vpop.xlane.xlu0 %983
    %v985 = vsel %vm775, %v863, 0.0
    %986 = vadd.xlane.f32.xlu0 %v985
    %v987 = vpop.xlane.xlu0 %986
    %v988 = vsel %vm775, %v865, 0.0
    %989 = vadd.xlane.f32.xlu0 %v988
    %v990 = vpop.xlane.xlu0 %989
    %v991 = vsel %vm775, %v867, 0.0
    %992 = vadd.xlane.f32.xlu0 %v991
    %v993 = vpop.xlane.xlu0 %992
    %v994 = vsel %vm775, %v869, 0.0
    %995 = vadd.xlane.f32.xlu0 %v994
    %v996 = vpop.xlane.xlu0 %995
    %v997 = vsel %vm775, %v871, 0.0
    %998 = vadd.xlane.f32.xlu0 %v997
    %v999 = vpop.xlane.xlu0 %998
    %v1000 = vrcp.pop %v954
    %v1001 = vrcp.pop %v957
    %v1002 = vrcp.pop %v960
    %v1003 = vrcp.pop %v963
    %v1004 = vrcp.pop %v966
    %v1005 = vrcp.pop %v969
    %v1006 = vrcp.pop %v972
    %v1007 = vrcp.pop %v975
    %v1008 = vrcp.pop %v978
    %v1009 = vrcp.pop %v981
    %v1010 = vrcp.pop %v984
    %v1011 = vrcp.pop %v987
    %v1012 = vrcp.pop %v990
    %v1013 = vrcp.pop %v993
    %v1014 = vrcp.pop %v996
    %v1015 = vrcp.pop %v999
    %v1016 = vmul.f32 %v906, %v1000
    %v1017 = vmul.f32 %v909, %v1001
    %v1018 = vmul.f32 %v912, %v1002
    %v1019 = vmul.f32 %v915, %v1003
    %v1020 = vmul.f32 %v918, %v1004
    %v1021 = vmul.f32 %v921, %v1005
    %v1022 = vmul.f32 %v924, %v1006
    %v1023 = vmul.f32 %v927, %v1007
    %v1024 = vmul.f32 %v930, %v1008
    %v1025 = vmul.f32 %v933, %v1009
    %v1026 = vmul.f32 %v936, %v1010
    %v1027 = vmul.f32 %v939, %v1011
    %v1028 = vmul.f32 %v942, %v1012
    %v1029 = vmul.f32 %v945, %v1013
    %v1030 = vmul.f32 %v948, %v1014
    %v1031 = vmul.f32 %v951, %v1015
    %v1048 = vlaneseq
    %v1049 = vand.u32 %v1048, 127
    %v1050 = vlaneseq
    %v1051 = vshrl.u32 %v1050, 7
    %v1052 = vsub.s32 %v1049, %v1051
    %v1053 = vrot.slane %v1016, %v1052
    %v1054 = vadd.s32 %v1049, 4294967288
    %v1055 = vlaneseq
    %v1056 = vshrl.u32 %v1055, 7
    %v1057 = vsub.s32 %v1054, %v1056
    %v1058 = vrot.slane %v1017, %v1057
    %vm1059 = vcmask 130112
    %v1060 = vsel %vm1059, %v1058, %v1053
    %v1061 = vadd.s32 %v1049, 4294967280
    %v1062 = vlaneseq
    %v1063 = vshrl.u32 %v1062, 7
    %v1064 = vsub.s32 %v1061, %v1063
    %v1065 = vrot.slane %v1018, %v1064
    %vm1066 = vcmask 195712
    %v1067 = vsel %vm1066, %v1065, %v1060
    %v1068 = vadd.s32 %v1049, 4294967272
    %v1069 = vlaneseq
    %v1070 = vshrl.u32 %v1069, 7
    %v1071 = vsub.s32 %v1068, %v1070
    %v1072 = vrot.slane %v1019, %v1071
    %vm1073 = vcmask 261312
    %v1074 = vsel %vm1073, %v1072, %v1067
    %v1075 = vadd.s32 %v1049, 4294967264
    %v1076 = vlaneseq
    %v1077 = vshrl.u32 %v1076, 7
    %v1078 = vsub.s32 %v1075, %v1077
    %v1079 = vrot.slane %v1020, %v1078
    %vm1080 = vcmask 326912
    %v1081 = vsel %vm1080, %v1079, %v1074
    %v1082 = vadd.s32 %v1049, 4294967256
    %v1083 = vlaneseq
    %v1084 = vshrl.u32 %v1083, 7
    %v1085 = vsub.s32 %v1082, %v1084
    %v1086 = vrot.slane %v1021, %v1085
    %vm1087 = vcmask 392512
    %v1088 = vsel %vm1087, %v1086, %v1081
    %v1089 = vadd.s32 %v1049, 4294967248
    %v1090 = vlaneseq
    %v1091 = vshrl.u32 %v1090, 7
    %v1092 = vsub.s32 %v1089, %v1091
    %v1093 = vrot.slane %v1022, %v1092
    %vm1094 = vcmask 458112
    %v1095 = vsel %vm1094, %v1093, %v1088
    %v1096 = vadd.s32 %v1049, 4294967240
    %v1097 = vlaneseq
    %v1098 = vshrl.u32 %v1097, 7
    %v1099 = vsub.s32 %v1096, %v1098
    %v1100 = vrot.slane %v1023, %v1099
    %vm1101 = vcmask 523712
    %v1102 = vsel %vm1101, %v1100, %v1095
    %v1103 = vadd.s32 %v1049, 4294967232
    %v1104 = vlaneseq
    %v1105 = vshrl.u32 %v1104, 7
    %v1106 = vsub.s32 %v1103, %v1105
    %v1107 = vrot.slane %v1024, %v1106
    %vm1108 = vcmask 589312
    %v1109 = vsel %vm1108, %v1107, %v1102
    %v1110 = vadd.s32 %v1049, 4294967224
    %v1111 = vlaneseq
    %v1112 = vshrl.u32 %v1111, 7
    %v1113 = vsub.s32 %v1110, %v1112
    %v1114 = vrot.slane %v1025, %v1113
    %vm1115 = vcmask 654912
    %v1116 = vsel %vm1115, %v1114, %v1109
    %v1117 = vadd.s32 %v1049, 4294967216
    %v1118 = vlaneseq
    %v1119 = vshrl.u32 %v1118, 7
    %v1120 = vsub.s32 %v1117, %v1119
    %v1121 = vrot.slane %v1026, %v1120
    %vm1122 = vcmask 720512
    %v1123 = vsel %vm1122, %v1121, %v1116
    %v1124 = vadd.s32 %v1049, 4294967208
    %v1125 = vlaneseq
    %v1126 = vshrl.u32 %v1125, 7
    %v1127 = vsub.s32 %v1124, %v1126
    %v1128 = vrot.slane %v1027, %v1127
    %vm1129 = vcmask 786112
    %v1130 = vsel %vm1129, %v1128, %v1123
    %v1131 = vadd.s32 %v1049, 4294967200
    %v1132 = vlaneseq
    %v1133 = vshrl.u32 %v1132, 7
    %v1134 = vsub.s32 %v1131, %v1133
    %v1135 = vrot.slane %v1028, %v1134
    %vm1136 = vcmask 851712
    %v1137 = vsel %vm1136, %v1135, %v1130
    %v1138 = vadd.s32 %v1049, 4294967192
    %v1139 = vlaneseq
    %v1140 = vshrl.u32 %v1139, 7
    %v1141 = vsub.s32 %v1138, %v1140
    %v1142 = vrot.slane %v1029, %v1141
    %vm1143 = vcmask 917312
    %v1144 = vsel %vm1143, %v1142, %v1137
    %v1145 = vadd.s32 %v1049, 4294967184
    %v1146 = vlaneseq
    %v1147 = vshrl.u32 %v1146, 7
    %v1148 = vsub.s32 %v1145, %v1147
    %v1149 = vrot.slane %v1030, %v1148
    %vm1150 = vcmask 982912
    %v1151 = vsel %vm1150, %v1149, %v1144
    %v1152 = vadd.s32 %v1049, 4294967176
    %v1153 = vlaneseq
    %v1154 = vshrl.u32 %v1153, 7
    %v1155 = vsub.s32 %v1152, %v1154
    %v1156 = vrot.slane %v1031, %v1155
    %vm1157 = vcmask 1048512
    %v1158 = vsel %vm1157, %v1156, %v1151
    %1160 = vst [vmem:[#allocation2] sm:$0x1] %v1158
    // Predicated region
    $region42: #{tpu_custom_call.1} parent=1 // pred_check
      _
    $region43: #{tpu_custom_call.1} parent=1 // pred_check_branch
      %1162 = sbr.rel (0) target = $region45
    $region44: #{tpu_custom_call.1} parent=1 // pred_region
      %s1164 = ssub.s32 16, 16
      %1165 = vsyncadd [#allocation3], %s1164
      %s1167 = sshll.u32 [#allocation2], 4
      %s1168 = int_to_ptr.vmem [resolvable:$true] %s1167
      %1170 = dma.vmem_to_hbm [thread:$0]  %s1168, 16, %s10, [#allocation3]
    $region45: #{tpu_custom_call.1} parent=1 // pred_fallthru
      _
    // Predicated region
    $region46: #{tpu_custom_call.1} parent=1 // pred_check
      _
    $region47: #{tpu_custom_call.1} parent=1 // pred_check_branch
      %1172 = sbr.rel (0) target = $region49
    $region48: #{tpu_custom_call.1} parent=1 // pred_region
      %1173 = dma.done [#allocation3], 16
    $region49: #{tpu_custom_call.1} parent=1 // pred_fallthru
      _
    %1174 = vsyncpa [#allocation3], 1

</llo_original>
